<compile_context>
chip_gen: v6e
topology: v6e:2x2x1
jax: 0.10.0
libtpu: 0.0.40
codegen_flags: <defaults>
</compile_context>

<pallas_src>
import jax
import jax.numpy as jnp
import numpy as np
from jax.experimental import pallas as pl
from jax.experimental.pallas import tpu as pltpu


def gated_fusion_kernel(x2_ref, x3_ref, x4_ref, w1_ref, w2_ref, o_ref):
    # x*_ref / o_ref : (Bt, C, HW)
    # w1_ref         : (3, C, hidden)   (W1^T split per branch, 1/HW folded in)
    # w2_ref         : (3, hidden)      (W2 in PyTorch (out, in) layout)
    x2 = x2_ref[...]
    x3 = x3_ref[...]
    x4 = x4_ref[...]

    # 1) spatial sums -> (Bt, C, 1); the mean's 1/HW scale lives in W1.
    s2 = jnp.sum(x2.astype(jnp.float32), axis=-1, keepdims=True)
    s3 = jnp.sum(x3.astype(jnp.float32), axis=-1, keepdims=True)
    s4 = jnp.sum(x4.astype(jnp.float32), axis=-1, keepdims=True)

    # 2) gating MLP entirely on VPU/XLU (no MXU pushes, no transposes).
    #    pre[b, c, j] = sum_branch s_branch[b, c] * W1[branch, c, j]
    pre = (s2 * w1_ref[0][None, :, :]
           + s3 * w1_ref[1][None, :, :]
           + s4 * w1_ref[2][None, :, :])                          # (Bt, C, hidden)
    h = jnp.maximum(jnp.sum(pre, axis=1, keepdims=True), 0.0)     # (Bt, 1, hidden)
    logits = jnp.sum(h * w2_ref[...][None, :, :], axis=-1,
                     keepdims=True)                               # (Bt, 3, 1)
    alpha = jax.nn.sigmoid(logits)                                # (Bt, 3, 1)

    # 3) weighted sum of the three branches (per-batch scalars broadcast
    #    over (C, HW)).
    a2 = alpha[:, 0:1, :]
    a3 = alpha[:, 1:2, :]
    a4 = alpha[:, 2:3, :]
    o_ref[...] = (a2 * x2 + a3 * x3 + a4 * x4).astype(o_ref.dtype)


def _pick_batch_tile(B, bytes_per_batch, vmem_limit_bytes):
    """Largest divisor of B whose block fits the double-buffered VMEM budget."""
    # 3 inputs + 1 output, double-buffered -> 8 live block copies;
    # keep ~25% headroom for weights / compiler temporaries.
    max_block_bytes = max(bytes_per_batch, (vmem_limit_bytes * 3) // (4 * 8))
    cap = max(1, max_block_bytes // bytes_per_batch)
    bt = 1
    for d in range(1, B + 1):
        if B % d == 0 and d <= cap:
            bt = d
    return bt


def gated_fusion(x2, x3, x4, w1, w2, *, vmem_limit_bytes=32 * 1024 * 1024):
    """x2/x3/x4: (B, C, H, W). w1: (hidden, 3C), w2: (3, hidden) (no bias)."""
    B, C, H, W = x2.shape
    HW = H * W
    hidden = w1.shape[0]

    x2f = x2.reshape(B, C, HW)
    x3f = x3.reshape(B, C, HW)
    x4f = x4.reshape(B, C, HW)

    # Wrapper-side layout plumbing: pre-split W1^T into per-branch (C, hidden)
    # blocks and fold in the 1/HW mean scale; keep W2 as (3, hidden).
    w1s = jnp.asarray(w1, jnp.float32).T.reshape(3, C, hidden) * (1.0 / HW)
    w2s = jnp.asarray(w2, jnp.float32)

    itemsize = jnp.dtype(x2f.dtype).itemsize
    Bt = _pick_batch_tile(B, C * HW * itemsize, vmem_limit_bytes)
    grid = (B // Bt,)

    x_spec = pl.BlockSpec((Bt, C, HW), lambda i: (i, 0, 0))
    w1_spec = pl.BlockSpec((3, C, hidden), lambda i: (0, 0, 0))
    w2_spec = pl.BlockSpec((3, hidden), lambda i: (0, 0))

    # Pure mem-bound kernel: 3 reads + 1 write of the feature maps.
    cost = pl.CostEstimate(
        flops=5 * B * C * HW + 2 * B * hidden * (3 * C + 3),
        transcendentals=3 * B,
        bytes_accessed=4 * B * C * HW * itemsize + (w1s.size + w2s.size) * 4,
    )

    out = pl.pallas_call(
        gated_fusion_kernel,
        out_shape=jax.ShapeDtypeStruct((B, C, HW), x2.dtype),
        grid_spec=pltpu.PrefetchScalarGridSpec(
            num_scalar_prefetch=0,
            grid=grid,
            in_specs=[x_spec, x_spec, x_spec, w1_spec, w2_spec],
            out_specs=pl.BlockSpec((Bt, C, HW), lambda i: (i, 0, 0)),
        ),
        compiler_params=pltpu.CompilerParams(
            dimension_semantics=("parallel",),
            vmem_limit_bytes=vmem_limit_bytes,
        ),
        cost_estimate=cost,
    )(x2f, x3f, x4f, w1s, w2s)
    return out.reshape(B, C, H, W)


def gated_fusion_ref(x2, x3, x4, w1, w2):
    """Pure-JAX reference matching the PyTorch forward."""
    B, C, _, _ = x2.shape
    p2 = x2.mean(axis=(2, 3))
    p3 = x3.mean(axis=(2, 3))
    p4 = x4.mean(axis=(2, 3))
    x_cat = jnp.concatenate([p2, p3, p4], axis=1)            # (B, 3C)
    h = jnp.maximum(x_cat @ w1.T, 0.0)                        # (B, hidden)
    alpha = jax.nn.sigmoid(h @ w2.T)                          # (B, 3)
    a2 = alpha[:, 0].reshape(B, 1, 1, 1)
    a3 = alpha[:, 1].reshape(B, 1, 1, 1)
    a4 = alpha[:, 2].reshape(B, 1, 1, 1)
    return a2 * x2 + a3 * x3 + a4 * x4


if __name__ == "__main__":
    B, C, H, W = 2, 4, 16, 16
    hidden = C // 2

    key = jax.random.PRNGKey(0)
    k2, k3, k4, kw1, kw2 = jax.random.split(key, 5)
    x2 = jax.random.normal(k2, (B, C, H, W), dtype=jnp.float32)
    x3 = jax.random.normal(k3, (B, C, H, W), dtype=jnp.float32)
    x4 = jax.random.normal(k4, (B, C, H, W), dtype=jnp.float32)

    # Deterministic synthetic weights (PyTorch Linear layout: (out, in), no bias)
    w1 = 0.1 * jax.random.normal(kw1, (hidden, 3 * C), dtype=jnp.float32)
    w2 = 0.1 * jax.random.normal(kw2, (3, hidden), dtype=jnp.float32)

    out = gated_fusion(x2, x3, x4, w1, w2)
    out = jax.block_until_ready(out)

    ref = gated_fusion_ref(x2, x3, x4, w1, w2)
    np.testing.assert_allclose(np.asarray(out), np.asarray(ref),
                               rtol=1e-5, atol=1e-5)
    print("KERNEL_OK")
</pallas_src>

<mosaic_0001>
module attributes {stable_mosaic.version = 11 : i64} {
  func.func @gated_fusion_kernel(%arg0: i32, %arg1: memref<2x4x256xf32, #tpu.memory_space<vmem>>, %arg2: memref<2x4x256xf32, #tpu.memory_space<vmem>>, %arg3: memref<2x4x256xf32, #tpu.memory_space<vmem>>, %arg4: memref<3x4x2xf32, #tpu.memory_space<vmem>>, %arg5: memref<3x2xf32, #tpu.memory_space<vmem>>, %arg6: memref<2x4x256xf32, #tpu.memory_space<vmem>>) attributes {dimension_semantics = [#tpu.dimension_semantics<parallel>], iteration_bounds = array<i64: 1>, scalar_prefetch = 0 : i64, scratch_operands = 0 : i64, tpu.core_type = #tpu.core_type<tc>, window_params = [{transform_indices = @transform_0, window_bounds = array<i64: 2, 4, 256>}, {transform_indices = @transform_1, window_bounds = array<i64: 2, 4, 256>}, {transform_indices = @transform_2, window_bounds = array<i64: 2, 4, 256>}, {pipeline_mode = #tpu.pipeline_mode<synchronous>, transform_indices = @transform_3, window_bounds = array<i64: 3, 4, 2>}, {pipeline_mode = #tpu.pipeline_mode<synchronous>, transform_indices = @transform_4, window_bounds = array<i64: 3, 2>}, {transform_indices = @transform_5, window_bounds = array<i64: 2, 4, 256>}]} {
    %c0 = arith.constant 0 : index
    %c0_0 = arith.constant 0 : index
    %c0_1 = arith.constant 0 : index
    %0 = vector.load %arg1[%c0, %c0_0, %c0_1] : memref<2x4x256xf32, #tpu.memory_space<vmem>>, vector<2x4x256xf32>
    %c0_2 = arith.constant 0 : index
    %c0_3 = arith.constant 0 : index
    %c0_4 = arith.constant 0 : index
    %1 = vector.load %arg2[%c0_2, %c0_3, %c0_4] : memref<2x4x256xf32, #tpu.memory_space<vmem>>, vector<2x4x256xf32>
    %c0_5 = arith.constant 0 : index
    %c0_6 = arith.constant 0 : index
    %c0_7 = arith.constant 0 : index
    %2 = vector.load %arg3[%c0_5, %c0_6, %c0_7] : memref<2x4x256xf32, #tpu.memory_space<vmem>>, vector<2x4x256xf32>
    %cst = arith.constant dense<0.000000e+00> : vector<2x4xf32>
    %3 = vector.multi_reduction <add>, %0, %cst [2] : vector<2x4x256xf32> to vector<2x4xf32>
    %4 = vector.shape_cast %3 : vector<2x4xf32> to vector<2x4x1xf32>
    %cst_8 = arith.constant dense<0.000000e+00> : vector<2x4xf32>
    %5 = vector.multi_reduction <add>, %1, %cst_8 [2] : vector<2x4x256xf32> to vector<2x4xf32>
    %6 = vector.shape_cast %5 : vector<2x4xf32> to vector<2x4x1xf32>
    %cst_9 = arith.constant dense<0.000000e+00> : vector<2x4xf32>
    %7 = vector.multi_reduction <add>, %2, %cst_9 [2] : vector<2x4x256xf32> to vector<2x4xf32>
    %8 = vector.shape_cast %7 : vector<2x4xf32> to vector<2x4x1xf32>
    %c0_10 = arith.constant 0 : index
    %c0_11 = arith.constant 0 : index
    %c0_12 = arith.constant 0 : index
    %9 = vector.load %arg4[%c0_10, %c0_11, %c0_12] : memref<3x4x2xf32, #tpu.memory_space<vmem>>, vector<1x4x2xf32>
    %10 = vector.shape_cast %9 : vector<1x4x2xf32> to vector<4x2xf32>
    %11 = vector.shape_cast %10 : vector<4x2xf32> to vector<1x4x2xf32>
    %12 = vector.broadcast %4 : vector<2x4x1xf32> to vector<2x4x2xf32>
    %13 = vector.broadcast %11 : vector<1x4x2xf32> to vector<2x4x2xf32>
    %14 = arith.mulf %12, %13 : vector<2x4x2xf32>
    %c1 = arith.constant 1 : index
    %c0_13 = arith.constant 0 : index
    %c0_14 = arith.constant 0 : index
    %15 = vector.load %arg4[%c1, %c0_13, %c0_14] : memref<3x4x2xf32, #tpu.memory_space<vmem>>, vector<1x4x2xf32>
    %16 = vector.shape_cast %15 : vector<1x4x2xf32> to vector<4x2xf32>
    %17 = vector.shape_cast %16 : vector<4x2xf32> to vector<1x4x2xf32>
    %18 = vector.broadcast %6 : vector<2x4x1xf32> to vector<2x4x2xf32>
    %19 = vector.broadcast %17 : vector<1x4x2xf32> to vector<2x4x2xf32>
    %20 = arith.mulf %18, %19 : vector<2x4x2xf32>
    %21 = arith.addf %14, %20 : vector<2x4x2xf32>
    %c2 = arith.constant 2 : index
    %c0_15 = arith.constant 0 : index
    %c0_16 = arith.constant 0 : index
    %22 = vector.load %arg4[%c2, %c0_15, %c0_16] : memref<3x4x2xf32, #tpu.memory_space<vmem>>, vector<1x4x2xf32>
    %23 = vector.shape_cast %22 : vector<1x4x2xf32> to vector<4x2xf32>
    %24 = vector.shape_cast %23 : vector<4x2xf32> to vector<1x4x2xf32>
    %25 = vector.broadcast %8 : vector<2x4x1xf32> to vector<2x4x2xf32>
    %26 = vector.broadcast %24 : vector<1x4x2xf32> to vector<2x4x2xf32>
    %27 = arith.mulf %25, %26 : vector<2x4x2xf32>
    %28 = arith.addf %21, %27 : vector<2x4x2xf32>
    %cst_17 = arith.constant dense<0.000000e+00> : vector<2x2xf32>
    %29 = vector.multi_reduction <add>, %28, %cst_17 [1] : vector<2x4x2xf32> to vector<2x2xf32>
    %30 = vector.shape_cast %29 : vector<2x2xf32> to vector<2x1x2xf32>
    %cst_18 = arith.constant 0.000000e+00 : f32
    %31 = vector.broadcast %cst_18 : f32 to vector<2x1x2xf32>
    %32 = arith.maximumf %30, %31 : vector<2x1x2xf32>
    %c0_19 = arith.constant 0 : index
    %c0_20 = arith.constant 0 : index
    %33 = vector.load %arg5[%c0_19, %c0_20] : memref<3x2xf32, #tpu.memory_space<vmem>>, vector<3x2xf32>
    %34 = vector.shape_cast %33 : vector<3x2xf32> to vector<1x3x2xf32>
    %35 = vector.broadcast %32 : vector<2x1x2xf32> to vector<2x3x2xf32>
    %36 = vector.broadcast %34 : vector<1x3x2xf32> to vector<2x3x2xf32>
    %37 = arith.mulf %35, %36 : vector<2x3x2xf32>
    %cst_21 = arith.constant dense<0.000000e+00> : vector<2x3xf32>
    %38 = vector.multi_reduction <add>, %37, %cst_21 [2] : vector<2x3x2xf32> to vector<2x3xf32>
    %39 = vector.shape_cast %38 : vector<2x3xf32> to vector<2x3x1xf32>
    %40 = arith.negf %39 : vector<2x3x1xf32>
    %41 = math.exp %40 : vector<2x3x1xf32>
    %cst_22 = arith.constant 1.000000e+00 : f32
    %42 = vector.broadcast %cst_22 : f32 to vector<2x3x1xf32>
    %43 = arith.addf %42, %41 : vector<2x3x1xf32>
    %44 = arith.divf %42, %43 : vector<2x3x1xf32>
    %45 = vector.extract_strided_slice %44 {offsets = [0, 0, 0], sizes = [2, 1, 1], strides = [1, 1, 1]} : vector<2x3x1xf32> to vector<2x1x1xf32>
    %46 = vector.extract_strided_slice %44 {offsets = [0, 1, 0], sizes = [2, 1, 1], strides = [1, 1, 1]} : vector<2x3x1xf32> to vector<2x1x1xf32>
    %47 = vector.extract_strided_slice %44 {offsets = [0, 2, 0], sizes = [2, 1, 1], strides = [1, 1, 1]} : vector<2x3x1xf32> to vector<2x1x1xf32>
    %48 = vector.broadcast %45 : vector<2x1x1xf32> to vector<2x4x256xf32>
    %49 = arith.mulf %48, %0 : vector<2x4x256xf32>
    %50 = vector.broadcast %46 : vector<2x1x1xf32> to vector<2x4x256xf32>
    %51 = arith.mulf %50, %1 : vector<2x4x256xf32>
    %52 = arith.addf %49, %51 : vector<2x4x256xf32>
    %53 = vector.broadcast %47 : vector<2x1x1xf32> to vector<2x4x256xf32>
    %54 = arith.mulf %53, %2 : vector<2x4x256xf32>
    %55 = arith.addf %52, %54 : vector<2x4x256xf32>
    %c0_23 = arith.constant 0 : index
    %c0_24 = arith.constant 0 : index
    %c0_25 = arith.constant 0 : index
    %56 = vector.load %arg6[%c0_23, %c0_24, %c0_25] : memref<2x4x256xf32, #tpu.memory_space<vmem>>, vector<2x4x256xf32>
    tpu.vector_store %arg6[%c0_23, %c0_24, %c0_25], %55 {strides = array<i32>} : memref<2x4x256xf32, #tpu.memory_space<vmem>>, vector<2x4x256xf32>,
    return
  }
  func.func @transform_0(%arg0: i32) -> (i32, i32, i32) {
    %c0_i32 = arith.constant 0 : i32
    %c0_i32_0 = arith.constant 0 : i32
    %c0_i32_1 = arith.constant 0 : i32
    return %arg0, %c0_i32, %c0_i32_0 : i32, i32, i32
  }
  func.func @transform_1(%arg0: i32) -> (i32, i32, i32) {
    %c0_i32 = arith.constant 0 : i32
    %c0_i32_0 = arith.constant 0 : i32
    %c0_i32_1 = arith.constant 0 : i32
    return %arg0, %c0_i32, %c0_i32_0 : i32, i32, i32
  }
  func.func @transform_2(%arg0: i32) -> (i32, i32, i32) {
    %c0_i32 = arith.constant 0 : i32
    %c0_i32_0 = arith.constant 0 : i32
    %c0_i32_1 = arith.constant 0 : i32
    return %arg0, %c0_i32, %c0_i32_0 : i32, i32, i32
  }
  func.func @transform_3(%arg0: i32) -> (i32, i32, i32) {
    %c0_i32 = arith.constant 0 : i32
    %c0_i32_0 = arith.constant 0 : i32
    %c0_i32_1 = arith.constant 0 : i32
    %c0_i32_2 = arith.constant 0 : i32
    return %c0_i32, %c0_i32_0, %c0_i32_1 : i32, i32, i32
  }
  func.func @transform_4(%arg0: i32) -> (i32, i32) {
    %c0_i32 = arith.constant 0 : i32
    %c0_i32_0 = arith.constant 0 : i32
    %c0_i32_1 = arith.constant 0 : i32
    return %c0_i32, %c0_i32_0 : i32, i32
  }
  func.func @transform_5(%arg0: i32) -> (i32, i32, i32) {
    %c0_i32 = arith.constant 0 : i32
    %c0_i32_0 = arith.constant 0 : i32
    %c0_i32_1 = arith.constant 0 : i32
    return %arg0, %c0_i32, %c0_i32_0 : i32, i32, i32
  }
}

</mosaic_0001>

<llo_original>
// kernel: tpu_custom_call.1
$region0: #{tpu_custom_call.1}
  #allocation0 [shape = 'u32[]', space=smem, size = 0x4, offset = 0x4, fixed_abs, tag = 'smem constant byte address 0x4 - core index']
  #allocation1 [shape = 'u32[144,128]{1,0:T(1,128)}', space=vmem, size = 0x12000, scoped, tag = 'internal scratch']
  %s0 = inlined_call_operand.vmem [shape: f32[2,4,256], index: 0, kind: input, shape index: {}]
  %s1 = inlined_call_operand.hbm [shape: f32[2,4,256], index: 1, kind: input, shape index: {}]
  %s2 = inlined_call_operand.hbm [shape: f32[2,4,256], index: 2, kind: input, shape index: {}]
  %s3 = inlined_call_operand.vmem [shape: f32[3,4,2], index: 3, kind: input, shape index: {}]
  %s4 = inlined_call_operand.vmem [shape: f32[3,2], index: 4, kind: input, shape index: {}]
  %s5 = inlined_call_operand.hbm [shape: f32[2,4,256], index: 5, kind: output, shape index: {}]
  %s6 = sld [smem:[#allocation0]]
  $region38: #{tpu_custom_call.1} parent=0
    _
  %s8 = ssub.s32 1, %s6
  %s9 = scalar_select 0, %s8, %s6
  $region1: #{tpu_custom_call.1} parent=0
    #allocation2 [shape = 'u8[8192]{0}', space=vmem, size = 0x2000, scoped, tag = 'input window, operand 1, single buffered']
    #allocation3 [shape = 's32[1]{0}', space=sflag, size = 0x4, scoped, tag = 'scoped memory for tpu_custom_call.1']
    #allocation4 [shape = 's32[1]{0}', space=sflag, size = 0x4, scoped, tag = 'scoped memory for tpu_custom_call.1']
    #allocation5 [shape = 'u8[8192]{0}', space=vmem, size = 0x2000, scoped, tag = 'input window, operand 2, single buffered']
    #allocation6 [shape = 's32[1]{0}', space=sflag, size = 0x4, scoped, tag = 'scoped memory for tpu_custom_call.1']
    #allocation7 [shape = 'u8[8192]{0}', space=vmem, size = 0x2000, scoped, tag = 'output window, operand 0, single buffered']
    %10 = vsyncpa [#allocation3], 0
    %11 = vsyncpa [#allocation6], 0
    %12 = vsyncpa [#allocation4], 0
    // Predicated region
    $region2: #{tpu_custom_call.1} parent=1 // pred_check
      _
    $region3: #{tpu_custom_call.1} parent=1 // pred_check_branch
      %14 = sbr.rel (0) target = $region5
    $region4: #{tpu_custom_call.1} parent=1 // pred_region
      _
    $region5: #{tpu_custom_call.1} parent=1 // pred_fallthru
      _
    // Predicated region
    $region6: #{tpu_custom_call.1} parent=1 // pred_check
      _
    $region7: #{tpu_custom_call.1} parent=1 // pred_check_branch
      %16 = sbr.rel (0) target = $region9
    $region8: #{tpu_custom_call.1} parent=1 // pred_region
      %s18 = ssub.s32 256, 256
      %19 = vsyncadd [#allocation3], %s18
      %s20 = sshll.u32 [#allocation2], 4
      %s21 = int_to_ptr.vmem [resolvable:$true] %s20
      %26 = dma.hbm_to_vmem [thread:$0]  %s1, 256, %s21, [#allocation3], 128, 128, 8
    $region9: #{tpu_custom_call.1} parent=1 // pred_fallthru
      _
    // Predicated region
    $region10: #{tpu_custom_call.1} parent=1 // pred_check
      _
    $region11: #{tpu_custom_call.1} parent=1 // pred_check_branch
      %28 = sbr.rel (0) target = $region13
    $region12: #{tpu_custom_call.1} parent=1 // pred_region
      %s30 = ssub.s32 256, 256
      %31 = vsyncadd [#allocation6], %s30
      %s32 = sshll.u32 [#allocation5], 4
      %s33 = int_to_ptr.vmem [resolvable:$true] %s32
      %38 = dma.hbm_to_vmem [thread:$0]  %s2, 256, %s33, [#allocation6], 128, 128, 8
    $region13: #{tpu_custom_call.1} parent=1 // pred_fallthru
      _
    // Predicated region
    $region14: #{tpu_custom_call.1} parent=1 // pred_check
      _
    $region15: #{tpu_custom_call.1} parent=1 // pred_check_branch
      %40 = sbr.rel (0) target = $region17
    $region16: #{tpu_custom_call.1} parent=1 // pred_region
      _
    $region17: #{tpu_custom_call.1} parent=1 // pred_fallthru
      _
    // Predicated region
    $region18: #{tpu_custom_call.1} parent=1 // pred_check
      _
    $region19: #{tpu_custom_call.1} parent=1 // pred_check_branch
      %42 = sbr.rel (0) target = $region21
    $region20: #{tpu_custom_call.1} parent=1 // pred_region
      _
    $region21: #{tpu_custom_call.1} parent=1 // pred_fallthru
      _
    // Predicated region
    $region22: #{tpu_custom_call.1} parent=1 // pred_check
      _
    $region23: #{tpu_custom_call.1} parent=1 // pred_check_branch
      %44 = sbr.rel (0) target = $region25
    $region24: #{tpu_custom_call.1} parent=1 // pred_region
      %45 = dma.done [#allocation3], 256
    $region25: #{tpu_custom_call.1} parent=1 // pred_fallthru
      _
    // Predicated region
    $region26: #{tpu_custom_call.1} parent=1 // pred_check
      _
    $region27: #{tpu_custom_call.1} parent=1 // pred_check_branch
      %47 = sbr.rel (0) target = $region29
    $region28: #{tpu_custom_call.1} parent=1 // pred_region
      %48 = dma.done [#allocation6], 256
    $region29: #{tpu_custom_call.1} parent=1 // pred_fallthru
      _
    %v49 = vld [vmem:[%s0] sm:$0xff]
    %v50 = vld [vmem:[%s0 + $0x8] sm:$0xff]
    %v51 = vld [vmem:[#allocation2] sm:$0xff]
    %v52 = vld [vmem:[#allocation2 + $0x8] sm:$0xff]
    %v53 = vld [vmem:[#allocation5] sm:$0xff]
    %v54 = vld [vmem:[#allocation5 + $0x8] sm:$0xff]
    %v57 = vcombine.high %v49, %v49
    %v58 = vcombine.high %v50, %v50
    %vm61 = vcmask 1043456
    %v62 = vsel %vm61, %v49, 0.0
    %v63 = vsel %vm61, %v57, 0.0
    %v64 = vadd.f32 %v62, %v63
    %65 = vadd.xlane.f32.xlu0 %v64
    %v66 = vpop.xlane.xlu0 %65
    %v67 = vsel %vm61, %v50, 0.0
    %v68 = vsel %vm61, %v58, 0.0
    %v69 = vadd.f32 %v67, %v68
    %70 = vadd.xlane.f32.xlu0 %v69
    %v71 = vpop.xlane.xlu0 %70
    %v74 = vcombine.high %v51, %v51
    %v75 = vcombine.high %v52, %v52
    %v78 = vsel %vm61, %v51, 0.0
    %v79 = vsel %vm61, %v74, 0.0
    %v80 = vadd.f32 %v78, %v79
    %81 = vadd.xlane.f32.xlu0 %v80
    %v82 = vpop.xlane.xlu0 %81
    %v83 = vsel %vm61, %v52, 0.0
    %v84 = vsel %vm61, %v75, 0.0
    %v85 = vadd.f32 %v83, %v84
    %86 = vadd.xlane.f32.xlu0 %v85
    %v87 = vpop.xlane.xlu0 %86
    %v90 = vcombine.high %v53, %v53
    %v91 = vcombine.high %v54, %v54
    %v94 = vsel %vm61, %v53, 0.0
    %v95 = vsel %vm61, %v90, 0.0
    %v96 = vadd.f32 %v94, %v95
    %97 = vadd.xlane.f32.xlu0 %v96
    %v98 = vpop.xlane.xlu0 %97
    %v99 = vsel %vm61, %v54, 0.0
    %v100 = vsel %vm61, %v91, 0.0
    %v101 = vadd.f32 %v99, %v100
    %102 = vadd.xlane.f32.xlu0 %v101
    %v103 = vpop.xlane.xlu0 %102
    %v104 = vld [vmem:[%s3] sm:$0xf]
    %v105 = vmul.f32 %v66, %v104
    %v106 = vmul.f32 %v71, %v104
    %s107 = scalar_lea.vmem %s3, 4
    %v108 = vld [vmem:[%s107] sm:$0xf]
    %v109 = vmul.f32 %v82, %v108
    %v110 = vmul.f32 %v87, %v108
    %v111 = vadd.f32 %v105, %v109
    %v112 = vadd.f32 %v106, %v110
    %s113 = scalar_lea.vmem %s3, 8
    %v114 = vld [vmem:[%s113] sm:$0xf]
    %v115 = vmul.f32 %v98, %v114
    %v116 = vmul.f32 %v103, %v114
    %v117 = vadd.f32 %v111, %v115
    %v118 = vadd.f32 %v112, %v116
    %vm119 = vcmask 11264
    %v120 = vsel %vm119, %v117, 0.0
    %v121 = vrot.slane %v120, 4
    %v122 = vadd.f32 %v120, %v121
    %v123 = vrot.slane %v122, 2
    %v124 = vadd.f32 %v122, %v123
    %v125 = vrot.slane %v124, 1
    %v126 = vadd.f32 %v124, %v125
    %v127 = vsel %vm119, %v118, 0.0
    %v128 = vrot.slane %v127, 4
    %v129 = vadd.f32 %v127, %v128
    %v130 = vrot.slane %v129, 2
    %v131 = vadd.f32 %v129, %v130
    %v132 = vrot.slane %v131, 1
    %v133 = vadd.f32 %v131, %v132
    %v134 = vmax.f32 %v126, 0.0
    %v135 = vmax.f32 %v133, 0.0
    %v136 = vld [vmem:[%s4] sm:$0x7]
    %v137 = vmul.f32 %v134, %v136
    %v138 = vmul.f32 %v135, %v136
    %vm139 = vcmask 10240
    %v140 = vsel %vm139, %v137, 0.0
    %141 = vadd.xlane.f32.xlu0 %v140
    %v142 = vpop.xlane.xlu0 %141
    %v143 = vsel %vm139, %v138, 0.0
    %144 = vadd.xlane.f32.xlu0 %v143
    %v145 = vpop.xlane.xlu0 %144
    %v146 = vxor.u32 %v142, 2147483648
    %v147 = vxor.u32 %v145, 2147483648
    %v148 = vmul.f32 %v146, 1.442695
    %v149 = vpow.pop %v148
    %v150 = vmul.f32 %v147, 1.442695
    %v151 = vpow.pop %v150
    %v152 = vadd.f32 %v149, 1.0
    %v153 = vadd.f32 %v151, 1.0
    %v154 = vrcp.pop %v152
    %v155 = vmul.f32 1.0, %v154
    %v156 = vrcp.pop %v153
    %v157 = vmul.f32 1.0, %v156
    %v158 = vlaneseq
    %v159 = vshrl.u32 %v158, 7
    %v160 = vsub.s32 0, %v159
    %v161 = vrot.slane %v155, %v160
    %v162 = vlaneseq
    %v163 = vshrl.u32 %v162, 7
    %v164 = vsub.s32 0, %v163
    %v165 = vrot.slane %v157, %v164
    %v166 = vmul.f32 %v161, %v49
    %v167 = vmul.f32 %v165, %v50
    %v168 = vlaneseq
    %v169 = vshrl.u32 %v168, 7
    %v170 = vsub.s32 1, %v169
    %v171 = vrot.slane %v155, %v170
    %v172 = vlaneseq
    %v173 = vshrl.u32 %v172, 7
    %v174 = vsub.s32 1, %v173
    %v175 = vrot.slane %v157, %v174
    %v176 = vmul.f32 %v171, %v51
    %v177 = vmul.f32 %v175, %v52
    %v178 = vadd.f32 %v166, %v176
    %v179 = vadd.f32 %v167, %v177
    %v180 = vlaneseq
    %v181 = vshrl.u32 %v180, 7
    %v182 = vsub.s32 2, %v181
    %v183 = vrot.slane %v155, %v182
    %v184 = vlaneseq
    %v185 = vshrl.u32 %v184, 7
    %v186 = vsub.s32 2, %v185
    %v187 = vrot.slane %v157, %v186
    %v188 = vmul.f32 %v183, %v53
    %v189 = vmul.f32 %v187, %v54
    %v190 = vadd.f32 %v178, %v188
    %v191 = vadd.f32 %v179, %v189
    %192 = vst [vmem:[#allocation7] sm:$0xff] %v190
    %193 = vst [vmem:[#allocation7 + $0x8] sm:$0xff] %v191
    // Predicated region
    $region30: #{tpu_custom_call.1} parent=1 // pred_check
      _
    $region31: #{tpu_custom_call.1} parent=1 // pred_check_branch
      %195 = sbr.rel (0) target = $region33
    $region32: #{tpu_custom_call.1} parent=1 // pred_region
      %s197 = ssub.s32 256, 256
      %198 = vsyncadd [#allocation4], %s197
      %s199 = sshll.u32 [#allocation7], 4
      %s200 = int_to_ptr.vmem [resolvable:$true] %s199
      %205 = dma.vmem_to_hbm [thread:$0]  %s200, 256, %s5, [#allocation4], 128, 128, 8
    $region33: #{tpu_custom_call.1} parent=1 // pred_fallthru
      _
    // Predicated region
    $region34: #{tpu_custom_call.1} parent=1 // pred_check
      _
    $region35: #{tpu_custom_call.1} parent=1 // pred_check_branch
      %207 = sbr.rel (0) target = $region37
    $region36: #{tpu_custom_call.1} parent=1 // pred_region
      %208 = dma.done [#allocation4], 256
    $region37: #{tpu_custom_call.1} parent=1 // pred_fallthru
      _
    %209 = vsyncpa [#allocation3], 1
    %210 = vsyncpa [#allocation6], 1
    %211 = vsyncpa [#allocation4], 1

</llo_original>
